<compile_context>
chip_gen: v7x
topology: tpu7x:2x2x1
jax: 0.10.0
libtpu: 0.0.40
codegen_flags: <defaults>
</compile_context>

<pallas_src>
import jax
import jax.numpy as jnp
from jax.experimental import pallas as pl
from jax.experimental.pallas import tpu as pltpu


_LANES = 128
# Sublane packing by dtype byte-width (f32 -> (8,128) vreg tile, bf16/f16 -> (16,128)).
_SUBLANES_BY_ITEMSIZE = {4: 8, 2: 16}
_PALLAS_SUPPORTED_DTYPES = frozenset({"float32", "bfloat16", "float16"})

# Below this many elements, fall back to plain XLA (fusable, launch-overhead free).
_PALLAS_MIN_ELEMENTS = 1 << 20            # ~4 MiB of f32

# Per-block byte budget and explicit scoped-VMEM limit (see header comment).
_MAX_BLOCK_BYTES = 4 * 1024 * 1024        # 4 MiB blocks
_MIN_BLOCK_BYTES = 512 * 1024             # never shrink below ~0.5 MiB / block
_VMEM_LIMIT_BYTES = 32 * 1024 * 1024      # safe on v5e/v6e (128 MiB) and v7x (64 MiB)
_TARGET_GRID_STEPS = 4                    # overlap in/out DMA; feed both v7x TCs


def _scale_reward_kernel(inv_ref, r_ref, o_ref):
    # inv_ref: SMEM f32[1] holding 1 / max(std + eps, G_r_max / g_max).
    # Hot path is a single VALU multiply per vreg; the upcast/downcast is a
    # no-op for f32 inputs and keeps bf16 inputs streaming at native HBM width.
    inv = inv_ref[0]
    o_ref[...] = (r_ref[...].astype(jnp.float32) * inv).astype(o_ref.dtype)


def _round_up(x: int, m: int) -> int:
    return -(-x // m) * m


def _pick_tile_rows(rows: int, sublanes: int, itemsize: int) -> int:
    """Row tile that is a multiple of the dtype's sublane packing, sized between
    _MIN_BLOCK_BYTES and _MAX_BLOCK_BYTES, preferring >= _TARGET_GRID_STEPS grid
    steps.  The grid uses pl.cdiv, so tile_rows need NOT divide rows."""
    bytes_per_row = _LANES * itemsize
    cap_rows = max((_MAX_BLOCK_BYTES // bytes_per_row) // sublanes * sublanes, sublanes)
    floor_rows = max((_MIN_BLOCK_BYTES // bytes_per_row) // sublanes * sublanes, sublanes)
    # Aim for at least _TARGET_GRID_STEPS steps (pipeline overlap, 2-TC work on
    # v7x), but never below the byte floor (per-step overhead) or above the cap.
    quarter_rows = _round_up(-(-rows // _TARGET_GRID_STEPS), sublanes)
    tile_rows = min(cap_rows, max(quarter_rows, floor_rows))
    # Never allocate a block larger than the (sublane-rounded) array itself.
    tile_rows = min(tile_rows, _round_up(rows, sublanes))
    tile_rows -= tile_rows % sublanes
    return max(tile_rows, sublanes)


def _reciprocal_denominator(std_scalar, g_r_max_scalar, g_max, epsilon):
    # Exact scalar math on the XLA scalar path (O(1) work, not the
    # pre-scale-the-tensor anti-pattern).
    # Note: epsilon=1e-8 added to an O(1) f32 std is below 1 ulp (a no-op),
    # matching the torch float32 behavior.
    var_denominator = jnp.asarray(std_scalar, jnp.float32) + jnp.float32(epsilon)
    min_required = jnp.asarray(g_r_max_scalar, jnp.float32) / jnp.float32(g_max)
    denominator = jnp.maximum(var_denominator, min_required)
    return (jnp.float32(1.0) / denominator).reshape(1)


def _scale_reward_jnp(rewards, std_scalar, g_r_max_scalar, g_max, epsilon):
    """Fallback: plain XLA (already HBM-roofline, fuses into neighboring ops)."""
    var_denominator = jnp.asarray(std_scalar, jnp.float32) + jnp.float32(epsilon)
    min_required = jnp.asarray(g_r_max_scalar, jnp.float32) / jnp.float32(g_max)
    denominator = jnp.maximum(var_denominator, min_required)
    return (rewards.astype(jnp.float32) / denominator).astype(rewards.dtype)


def _pallas_eligible(rewards) -> bool:
    return (rewards.size > 0
            and rewards.size % _LANES == 0
            and jnp.dtype(rewards.dtype).name in _PALLAS_SUPPORTED_DTYPES)


def scale_reward_pallas(rewards, std_scalar, g_r_max_scalar, g_max, epsilon):
    """rewards: any-shape tensor (f32 / bf16 / f16); scalars are 0-d floats.

    Inputs whose element count is not lane-aligned (multiple of 128) or whose
    dtype has no TPU vreg tiling are routed to the XLA fallback — no pad/slice
    HBM round trip for ragged tensors."""
    if not _pallas_eligible(rewards):
        return _scale_reward_jnp(rewards, std_scalar, g_r_max_scalar, g_max, epsilon)

    orig_shape = rewards.shape
    dtype = rewards.dtype
    n = rewards.size

    inv = _reciprocal_denominator(std_scalar, g_r_max_scalar, g_max, epsilon)

    itemsize = jnp.dtype(dtype).itemsize
    sublanes = _SUBLANES_BY_ITEMSIZE[itemsize]

    rows = n // _LANES
    x2d = rewards.reshape(rows, _LANES)     # lane-dense slab, free reshape
    tile_rows = _pick_tile_rows(rows, sublanes, itemsize)
    grid = (pl.cdiv(rows, tile_rows),)      # partial last block handled by Pallas

    out2d = pl.pallas_call(
        _scale_reward_kernel,
        out_shape=jax.ShapeDtypeStruct((rows, _LANES), dtype),
        grid_spec=pltpu.PrefetchScalarGridSpec(
            num_scalar_prefetch=1,
            grid=grid,
            in_specs=[pl.BlockSpec((tile_rows, _LANES), lambda i, inv_s: (i, 0))],
            out_specs=pl.BlockSpec((tile_rows, _LANES), lambda i, inv_s: (i, 0)),
        ),
        compiler_params=pltpu.CompilerParams(
            dimension_semantics=(pltpu.PARALLEL,),
            vmem_limit_bytes=_VMEM_LIMIT_BYTES),
    )(inv, x2d)

    return out2d.reshape(orig_shape)


class RewardNormalizer:
    """JAX/Pallas port of fast_td3_utils.RewardNormalizer (forward pass only)."""

    def __init__(self, gamma: float, g_max: float = 10.0, epsilon: float = 1e-8):
        self.gamma = gamma
        self.g_max = g_max
        self.epsilon = epsilon
        # Deterministic buffer init, matching the torch module's __init__:
        self.G = jnp.zeros((1,), jnp.float32)
        self.G_r_max = jnp.zeros((1,), jnp.float32)
        # EmpiricalNormalization(shape=1) buffers:
        self.G_rms_mean = jnp.zeros((1, 1), jnp.float32)
        self.G_rms_var = jnp.ones((1, 1), jnp.float32)
        self.G_rms_std = jnp.ones((1, 1), jnp.float32)
        self.count = 0
        # TODO(synk): update_stats() / EmpiricalNormalization.update() is stateful
        # Welford scalar bookkeeping (host-side glue) and is not ported to Pallas.

    def __call__(self, rewards):
        std = self.G_rms_std[0, 0]        # G_rms.std[0]
        g_r_max = self.G_r_max[0]
        if rewards.size < _PALLAS_MIN_ELEMENTS or not _pallas_eligible(rewards):
            # Real fast_td3 case: per-env scalar rewards (a few hundred floats)
            # — let XLA emit/fuse the scale.
            return _scale_reward_jnp(rewards, std, g_r_max, self.g_max, self.epsilon)
        return scale_reward_pallas(rewards, std, g_r_max, self.g_max, self.epsilon)


def _reference_scale(rewards, std_scalar, g_r_max_scalar, g_max, epsilon):
    var_denominator = jnp.asarray(std_scalar, jnp.float32) + jnp.float32(epsilon)
    min_required = jnp.asarray(g_r_max_scalar, jnp.float32) / jnp.float32(g_max)
    denominator = jnp.maximum(var_denominator, min_required)
    return (rewards.astype(jnp.float32) / denominator).astype(rewards.dtype)


if __name__ == "__main__":
    key = jax.random.PRNGKey(0)
    k1, k2, k3, k4 = jax.random.split(key, 4)

    normalizer = RewardNormalizer(gamma=0.99)
    # Non-trivial running stats so the scale is actually exercised:
    # denom = max(2.5 + 1e-8, 40.0 / 10.0) = 4.0
    normalizer.G_rms_std = jnp.full((1, 1), 2.5, jnp.float32)
    normalizer.G_r_max = jnp.full((1,), 40.0, jnp.float32)
    std = normalizer.G_rms_std[0, 0]
    g_r_max = normalizer.G_r_max[0]

    # 1) Real fast_td3 shape: per-env rewards -> small-size (XLA) fallback.
    rewards_small = jax.random.normal(k1, (256,), jnp.float32) * 3.0
    out_small = jax.block_until_ready(normalizer(rewards_small))
    ref_small = _reference_scale(rewards_small, std, g_r_max,
                                 normalizer.g_max, normalizer.epsilon)
    assert out_small.shape == rewards_small.shape
    assert out_small.dtype == rewards_small.dtype
    assert jnp.allclose(out_small, ref_small, rtol=1e-6, atol=1e-6)

    # 2) Lane-aligned f32 tensor forced through the Pallas kernel
    #    (rows=4096 -> tile_rows=1024 -> grid=(4,), full blocks).
    rewards_f32 = jax.random.normal(k2, (4096, 128), jnp.float32) * 3.0
    out_f32 = jax.block_until_ready(
        scale_reward_pallas(rewards_f32, std, g_r_max,
                            normalizer.g_max, normalizer.epsilon))
    ref_f32 = _reference_scale(rewards_f32, std, g_r_max,
                               normalizer.g_max, normalizer.epsilon)
    assert out_f32.shape == rewards_f32.shape and out_f32.dtype == rewards_f32.dtype
    assert jnp.allclose(out_f32, ref_f32, rtol=1e-6, atol=1e-6)

    # 3) Lane-aligned but row count not a multiple of tile_rows -> cdiv grid
    #    with a partial last block (rows=1032, tile_rows=1024, grid=(2,)).
    rewards_ragged = jax.random.normal(k3, (1032 * 128,), jnp.float32) * 3.0
    out_ragged = jax.block_until_ready(
        scale_reward_pallas(rewards_ragged, std, g_r_max,
                            normalizer.g_max, normalizer.epsilon))
    ref_ragged = _reference_scale(rewards_ragged, std, g_r_max,
                                  normalizer.g_max, normalizer.epsilon)
    assert out_ragged.shape == rewards_ragged.shape
    assert jnp.allclose(out_ragged, ref_ragged, rtol=1e-6, atol=1e-6)

    # 4) bf16 rewards stream at native width, cast in-vreg.
    rewards_bf16 = (jax.random.normal(k4, (2048 * 128,), jnp.float32) * 3.0
                    ).astype(jnp.bfloat16)
    out_bf16 = jax.block_until_ready(
        scale_reward_pallas(rewards_bf16, std, g_r_max,
                            normalizer.g_max, normalizer.epsilon))
    ref_bf16 = _reference_scale(rewards_bf16, std, g_r_max,
                                normalizer.g_max, normalizer.epsilon)
    assert out_bf16.shape == rewards_bf16.shape
    assert out_bf16.dtype == jnp.bfloat16
    assert jnp.allclose(out_bf16.astype(jnp.float32),
                        ref_bf16.astype(jnp.float32), rtol=2e-2, atol=1e-2)

    # 5) Large tensor through the class dispatch (>= _PALLAS_MIN_ELEMENTS
    #    elements -> Pallas path; rows=8192, tile_rows=2048, grid=(4,)).
    rewards_big = jax.random.normal(k2, (8192 * 128,), jnp.float32) * 3.0
    out_big = jax.block_until_ready(normalizer(rewards_big))
    ref_big = _reference_scale(rewards_big, std, g_r_max,
                               normalizer.g_max, normalizer.epsilon)
    assert out_big.shape == rewards_big.shape and out_big.dtype == rewards_big.dtype
    assert jnp.allclose(out_big, ref_big, rtol=1e-6, atol=1e-6)

    # 6) Non-lane-aligned large tensor -> routed to XLA fallback (no pad/slice).
    rewards_odd = jax.random.normal(k3, (100001,), jnp.float32) * 3.0
    out_odd = jax.block_until_ready(normalizer(rewards_odd))
    ref_odd = _reference_scale(rewards_odd, std, g_r_max,
                               normalizer.g_max, normalizer.epsilon)
    assert jnp.allclose(out_odd, ref_odd, rtol=1e-6, atol=1e-6)

    print("KERNEL_OK")
</pallas_src>

<mosaic_0001>
module attributes {stable_mosaic.version = 11 : i64} {
  func.func @_scale_reward_kernel(%arg0: i32, %arg1: memref<1xf32, #tpu.memory_space<smem>>, %arg2: memref<1024x128xf32, #tpu.memory_space<vmem>>, %arg3: memref<1024x128xf32, #tpu.memory_space<vmem>>) attributes {dimension_semantics = [#tpu.dimension_semantics<parallel>], iteration_bounds = array<i64: 4>, scalar_prefetch = 1 : i64, scratch_operands = 0 : i64, tpu.core_type = #tpu.core_type<tc>, window_params = [{transform_indices = @transform_0, window_bounds = array<i64: 1024, 128>}, {transform_indices = @transform_1, window_bounds = array<i64: 1024, 128>}]} {
    %c0 = arith.constant 0 : index
    %0 = memref.load %arg1[%c0] : memref<1xf32, #tpu.memory_space<smem>>
    %c0_0 = arith.constant 0 : index
    %c0_1 = arith.constant 0 : index
    %1 = vector.load %arg2[%c0_0, %c0_1] : memref<1024x128xf32, #tpu.memory_space<vmem>>, vector<1024x128xf32>
    %2 = vector.broadcast %0 : f32 to vector<1024x128xf32>
    %3 = arith.mulf %1, %2 : vector<1024x128xf32>
    %c0_2 = arith.constant 0 : index
    %c0_3 = arith.constant 0 : index
    %4 = vector.load %arg3[%c0_2, %c0_3] : memref<1024x128xf32, #tpu.memory_space<vmem>>, vector<1024x128xf32>
    tpu.vector_store %arg3[%c0_2, %c0_3], %3 {strides = array<i32>} : memref<1024x128xf32, #tpu.memory_space<vmem>>, vector<1024x128xf32>,
    return
  }
  func.func @transform_0(%arg0: i32, %arg1: memref<1xf32, #tpu.memory_space<smem>>) -> (i32, i32) {
    %c0_i32 = arith.constant 0 : i32
    %c0_i32_0 = arith.constant 0 : i32
    return %arg0, %c0_i32 : i32, i32
  }
  func.func @transform_1(%arg0: i32, %arg1: memref<1xf32, #tpu.memory_space<smem>>) -> (i32, i32) {
    %c0_i32 = arith.constant 0 : i32
    %c0_i32_0 = arith.constant 0 : i32
    return %arg0, %c0_i32 : i32, i32
  }
}

</mosaic_0001>

<llo_original>
// kernel: tpu_custom_call.1
$region0: #{tpu_custom_call.1}
  #allocation0 [shape = 'u32[]', space=smem, size = 0x4, offset = 0x4, fixed_abs, tag = 'smem constant byte address 0x4 - core index']
  #allocation1 [shape = 'u32[144,128]{1,0:T(1,128)}', space=vmem, size = 0x12000, scoped, tag = 'internal scratch']
  #allocation2 [shape = 's32[1]{0}', space=sflag, size = 0x4, scoped, tag = 'scoped memory for tpu_custom_call.1']
  #allocation3 [shape = 'f32[1]{0:T(128)S(6)}', space=smem, size = 0x200, scoped, tag = 'prefetched SMEM operand 0']
  %s0 = inlined_call_operand.<no memory space> [shape: f32[1], index: 0, kind: input, shape index: {}]
  %s1 = inlined_call_operand.hbm [shape: f32[4096,128], index: 1, kind: input, shape index: {}]
  %s2 = inlined_call_operand.hbm [shape: f32[4096,128], index: 2, kind: output, shape index: {}]
  %s3 = sld [smem:[#allocation0]]
  $region41: #{tpu_custom_call.1} parent=0
    _
  %s5 = ssub.s32 1, %s3
  %s6 = scalar_select 0, %s5, %s3
  %7 = sst [smem:[#allocation3]] %s0
  $region1: #{tpu_custom_call.1} parent=0
    #allocation4 [shape = 'u8[1048576]{0}', space=vmem, size = 0x100000, scoped, tag = 'input window, operand 1']
    #allocation5 [shape = 's32[2]{0}', space=sflag, size = 0x8, scoped, tag = 'scoped memory for tpu_custom_call.1']
    #allocation6 [shape = 's32[2]{0}', space=sflag, size = 0x8, scoped, tag = 'scoped memory for tpu_custom_call.1']
    #allocation7 [shape = 'u8[1048576]{0}', space=vmem, size = 0x100000, scoped, tag = 'output window, operand 0']
    %8 = vsyncpa [#allocation5], 0
    %s9 = scalar_lea.sflag [#allocation5], 1
    %10 = vsyncpa %s9, 0
    %11 = vsyncpa [#allocation6], 0
    %s12 = scalar_lea.sflag [#allocation6], 1
    %13 = vsyncpa %s12, 0
    loop: start=0, step=1, limit=6
    $region2: #{tpu_custom_call.1} parent=1 // loop_pre_header
      _
    $region3: #{tpu_custom_call.1} parent=1 // loop_header
      %s15 = sphi 0, %s19
      %p16 = scmp.ge.s32.totalorder %s15, 6
      %s25 = sphi 0, %s27
      %s28 = sphi 0, %s25
      %s29 = sphi 0, %s28
      %s45 = sphi 0, %s29
      %s51 = sphi 0, %s53
      %s54 = sphi 0, %s51
      %s55 = sphi 0, %s54
      %s71 = sphi 0, %s55
    $region4: #{tpu_custom_call.1} parent=1 // loop_header_branch
      %18 = sbr.rel (%p16) target = $region8
    $region5: #{tpu_custom_call.1} parent=1 // loop_body
      %s20 = ssub.s32 %s15, 1
      %s21 = ssub.s32 %s15, 2
      %s22 = sadd.s32 %s15, 1
      %s23 = ssub.s32 %s15, %s22
      %p24 = scmp.eq.s32.totalorder %s23, 0
      %s26 = sadd.s32 %s25, 1
      %s27 = scalar_select %p24, %s25, %s26
      %p30 = pneg %p24
      %p31 = scmp.eq.s32.totalorder %s15, 3
      %p32 = por %p30, %p31
      %p33 = scmp.ne.s32.totalorder %s25, %s28
      %p34 = scmp.eq.s32.totalorder %s15, 0
      %p35 = por %p33, %p34
      %p36 = scmp.ne.s32.totalorder %s25, %s28
      %p37 = scmp.eq.s32.totalorder %s20, 3
      %p38 = por %p36, %p37
      %p39 = scmp.ne.s32.totalorder %s28, %s29
      %p40 = scmp.eq.s32.totalorder %s20, 0
      %p41 = por %p39, %p40
      %p42 = scmp.ne.s32.totalorder %s28, %s29
      %p43 = scmp.eq.s32.totalorder %s21, 3
      %p44 = por %p42, %p43
      %p46 = scmp.ne.s32.totalorder %s29, %s45
      %p47 = scmp.eq.s32.totalorder %s21, 0
      %p48 = por %p46, %p47
      %s49 = ssub.s32 %s15, %s22
      %p50 = scmp.eq.s32.totalorder %s49, 0
      %s52 = sadd.s32 %s51, 1
      %s53 = scalar_select %p50, %s51, %s52
      %p56 = pneg %p50
      %p57 = scmp.eq.s32.totalorder %s15, 3
      %p58 = por %p56, %p57
      %p59 = scmp.ne.s32.totalorder %s51, %s54
      %p60 = scmp.eq.s32.totalorder %s15, 0
      %p61 = por %p59, %p60
      %p62 = scmp.ne.s32.totalorder %s51, %s54
      %p63 = scmp.eq.s32.totalorder %s20, 3
      %p64 = por %p62, %p63
      %p65 = scmp.ne.s32.totalorder %s54, %s55
      %p66 = scmp.eq.s32.totalorder %s20, 0
      %p67 = por %p65, %p66
      %p68 = scmp.ne.s32.totalorder %s54, %s55
      %p69 = scmp.eq.s32.totalorder %s21, 3
      %p70 = por %p68, %p69
      %p72 = scmp.ne.s32.totalorder %s55, %s71
      %p73 = scmp.eq.s32.totalorder %s21, 0
      %p74 = por %p72, %p73
      %p75 = scmp.le.s32.totalorder 1, %s15
      %p76 = scmp.lt.s32.totalorder %s15, 5
      %p77 = pnand %p75, %p76
      %p78 = pneg %p77
      // Predicated region
      $region9: #{tpu_custom_call.1} parent=5 // pred_check
        _
      $region10: #{tpu_custom_call.1} parent=5 // pred_check_branch
        %80 = sbr.rel (%p77) target = $region12
      $region11: #{tpu_custom_call.1} parent=5 // pred_region
        %s81 = ssub.s32 %s15, 1
      $region12: #{tpu_custom_call.1} parent=5 // pred_fallthru
        _
      %p82 = scmp.lt.s32.totalorder %s15, 4
      // Predicated region
      $region13: #{tpu_custom_call.1} parent=5 // pred_check
        %p83 = pneg %p82
      $region14: #{tpu_custom_call.1} parent=5 // pred_check_branch
        %85 = sbr.rel (%p83) target = $region16
      $region15: #{tpu_custom_call.1} parent=5 // pred_region
        // Predicated region
        $region17: #{tpu_custom_call.1} parent=15 // pred_check
          %p86 = pneg %p35
        $region18: #{tpu_custom_call.1} parent=15 // pred_check_branch
          %88 = sbr.rel (%p86) target = $region20
        $region19: #{tpu_custom_call.1} parent=15 // pred_region
          %s89 = sand.u32 %s25, 1
          %s90 = scalar_lea.sflag [#allocation5], %s89
          %s91 = sand.u32 %s25, 1
          %s92 = smul.addr %s91, 1024
          %s93 = scalar_lea.vmem [#allocation4], %s92
          %s94 = smul.u32 128, %s15
          %s96 = ssub.s32 16384, 16384
          %97 = vsyncadd %s90, %s96
          %s98 = smul.addr %s94, 128
          %s99 = scalar_lea.hbm %s1, %s98
          %s100 = sshll.u32 %s93, 4
          %s101 = int_to_ptr.vmem [resolvable:$true] %s100
          %106 = dma.hbm_to_vmem [thread:$0]  %s99, 16384, %s101, %s90, 128, 128, 8
        $region20: #{tpu_custom_call.1} parent=15 // pred_fallthru
          _
      $region16: #{tpu_custom_call.1} parent=5 // pred_fallthru
        _
      %p107 = scmp.le.s32.totalorder 1, %s15
      %p108 = scmp.lt.s32.totalorder %s15, 5
      %p109 = pnand %p107, %p108
      %p110 = pneg %p109
      // Predicated region
      $region21: #{tpu_custom_call.1} parent=5 // pred_check
        _
      $region22: #{tpu_custom_call.1} parent=5 // pred_check_branch
        %112 = sbr.rel (%p109) target = $region24
      $region23: #{tpu_custom_call.1} parent=5 // pred_region
        %s113 = ssub.s32 %s15, 1
        %s114 = sand.u32 %s28, 1
        %s115 = scalar_lea.sflag [#allocation5], %s114
        %s116 = sand.u32 %s28, 1
        %s117 = smul.addr %s116, 1024
        %s118 = scalar_lea.vmem [#allocation4], %s117
        // Predicated region
        $region25: #{tpu_custom_call.1} parent=23 // pred_check
          %p119 = pneg %p41
        $region26: #{tpu_custom_call.1} parent=23 // pred_check_branch
          %121 = sbr.rel (%p119) target = $region28
        $region27: #{tpu_custom_call.1} parent=23 // pred_region
          %122 = dma.done %s115, 16384
        $region28: #{tpu_custom_call.1} parent=23 // pred_fallthru
          _
        %s123 = sand.u32 %s28, 1
        %s124 = scalar_lea.sflag [#allocation5], %s123
        %s125 = sand.u32 %s28, 1
        %s126 = smul.addr %s125, 1024
        %s127 = scalar_lea.vmem [#allocation4], %s126
        %p128 = pneg %p41
        %p129 = pneg %p38
        %p130 = pneg %p67
        %p131 = pneg %p64
        %s132 = sand.u32 %s54, 1
        %s133 = scalar_lea.sflag [#allocation6], %s132
        %s134 = sand.u32 %s54, 1
        %s135 = smul.addr %s134, 1024
        %s136 = scalar_lea.vmem [#allocation7], %s135
        %s137 = smul.u32 128, %s20
        %s138 = smul.u32 128, %s20
        %s139 = sld [smem:[#allocation3]]
        %v140 = vld [vmem:[%s118] sm:$0xff]
        %v141 = vld [vmem:[%s118 + $0x8] sm:$0xff]
        %v142 = vld [vmem:[%s118 + $0x10] sm:$0xff]
        %v143 = vld [vmem:[%s118 + $0x18] sm:$0xff]
        %v144 = vld [vmem:[%s118 + $0x20] sm:$0xff]
        %v145 = vld [vmem:[%s118 + $0x28] sm:$0xff]
        %v146 = vld [vmem:[%s118 + $0x30] sm:$0xff]
        %v147 = vld [vmem:[%s118 + $0x38] sm:$0xff]
        %v148 = vld [vmem:[%s118 + $0x40] sm:$0xff]
        %v149 = vld [vmem:[%s118 + $0x48] sm:$0xff]
        %v150 = vld [vmem:[%s118 + $0x50] sm:$0xff]
        %v151 = vld [vmem:[%s118 + $0x58] sm:$0xff]
        %v152 = vld [vmem:[%s118 + $0x60] sm:$0xff]
        %v153 = vld [vmem:[%s118 + $0x68] sm:$0xff]
        %v154 = vld [vmem:[%s118 + $0x70] sm:$0xff]
        %v155 = vld [vmem:[%s118 + $0x78] sm:$0xff]
        %v156 = vld [vmem:[%s118 + $0x80] sm:$0xff]
        %v157 = vld [vmem:[%s118 + $0x88] sm:$0xff]
        %v158 = vld [vmem:[%s118 + $0x90] sm:$0xff]
        %v159 = vld [vmem:[%s118 + $0x98] sm:$0xff]
        %v160 = vld [vmem:[%s118 + $0xa0] sm:$0xff]
        %v161 = vld [vmem:[%s118 + $0xa8] sm:$0xff]
        %v162 = vld [vmem:[%s118 + $0xb0] sm:$0xff]
        %v163 = vld [vmem:[%s118 + $0xb8] sm:$0xff]
        %v164 = vld [vmem:[%s118 + $0xc0] sm:$0xff]
        %v165 = vld [vmem:[%s118 + $0xc8] sm:$0xff]
        %v166 = vld [vmem:[%s118 + $0xd0] sm:$0xff]
        %v167 = vld [vmem:[%s118 + $0xd8] sm:$0xff]
        %v168 = vld [vmem:[%s118 + $0xe0] sm:$0xff]
        %v169 = vld [vmem:[%s118 + $0xe8] sm:$0xff]
        %v170 = vld [vmem:[%s118 + $0xf0] sm:$0xff]
        %v171 = vld [vmem:[%s118 + $0xf8] sm:$0xff]
        %v172 = vld [vmem:[%s118 + $0x100] sm:$0xff]
        %v173 = vld [vmem:[%s118 + $0x108] sm:$0xff]
        %v174 = vld [vmem:[%s118 + $0x110] sm:$0xff]
        %v175 = vld [vmem:[%s118 + $0x118] sm:$0xff]
        %v176 = vld [vmem:[%s118 + $0x120] sm:$0xff]
        %v177 = vld [vmem:[%s118 + $0x128] sm:$0xff]
        %v178 = vld [vmem:[%s118 + $0x130] sm:$0xff]
        %v179 = vld [vmem:[%s118 + $0x138] sm:$0xff]
        %v180 = vld [vmem:[%s118 + $0x140] sm:$0xff]
        %v181 = vld [vmem:[%s118 + $0x148] sm:$0xff]
        %v182 = vld [vmem:[%s118 + $0x150] sm:$0xff]
        %v183 = vld [vmem:[%s118 + $0x158] sm:$0xff]
        %v184 = vld [vmem:[%s118 + $0x160] sm:$0xff]
        %v185 = vld [vmem:[%s118 + $0x168] sm:$0xff]
        %v186 = vld [vmem:[%s118 + $0x170] sm:$0xff]
        %v187 = vld [vmem:[%s118 + $0x178] sm:$0xff]
        %v188 = vld [vmem:[%s118 + $0x180] sm:$0xff]
        %v189 = vld [vmem:[%s118 + $0x188] sm:$0xff]
        %v190 = vld [vmem:[%s118 + $0x190] sm:$0xff]
        %v191 = vld [vmem:[%s118 + $0x198] sm:$0xff]
        %v192 = vld [vmem:[%s118 + $0x1a0] sm:$0xff]
        %v193 = vld [vmem:[%s118 + $0x1a8] sm:$0xff]
        %v194 = vld [vmem:[%s118 + $0x1b0] sm:$0xff]
        %v195 = vld [vmem:[%s118 + $0x1b8] sm:$0xff]
        %v196 = vld [vmem:[%s118 + $0x1c0] sm:$0xff]
        %v197 = vld [vmem:[%s118 + $0x1c8] sm:$0xff]
        %v198 = vld [vmem:[%s118 + $0x1d0] sm:$0xff]
        %v199 = vld [vmem:[%s118 + $0x1d8] sm:$0xff]
        %v200 = vld [vmem:[%s118 + $0x1e0] sm:$0xff]
        %v201 = vld [vmem:[%s118 + $0x1e8] sm:$0xff]
        %v202 = vld [vmem:[%s118 + $0x1f0] sm:$0xff]
        %v203 = vld [vmem:[%s118 + $0x1f8] sm:$0xff]
        %v204 = vld [vmem:[%s118 + $0x200] sm:$0xff]
        %v205 = vld [vmem:[%s118 + $0x208] sm:$0xff]
        %v206 = vld [vmem:[%s118 + $0x210] sm:$0xff]
        %v207 = vld [vmem:[%s118 + $0x218] sm:$0xff]
        %v208 = vld [vmem:[%s118 + $0x220] sm:$0xff]
        %v209 = vld [vmem:[%s118 + $0x228] sm:$0xff]
        %v210 = vld [vmem:[%s118 + $0x230] sm:$0xff]
        %v211 = vld [vmem:[%s118 + $0x238] sm:$0xff]
        %v212 = vld [vmem:[%s118 + $0x240] sm:$0xff]
        %v213 = vld [vmem:[%s118 + $0x248] sm:$0xff]
        %v214 = vld [vmem:[%s118 + $0x250] sm:$0xff]
        %v215 = vld [vmem:[%s118 + $0x258] sm:$0xff]
        %v216 = vld [vmem:[%s118 + $0x260] sm:$0xff]
        %v217 = vld [vmem:[%s118 + $0x268] sm:$0xff]
        %v218 = vld [vmem:[%s118 + $0x270] sm:$0xff]
        %v219 = vld [vmem:[%s118 + $0x278] sm:$0xff]
        %v220 = vld [vmem:[%s118 + $0x280] sm:$0xff]
        %v221 = vld [vmem:[%s118 + $0x288] sm:$0xff]
        %v222 = vld [vmem:[%s118 + $0x290] sm:$0xff]
        %v223 = vld [vmem:[%s118 + $0x298] sm:$0xff]
        %v224 = vld [vmem:[%s118 + $0x2a0] sm:$0xff]
        %v225 = vld [vmem:[%s118 + $0x2a8] sm:$0xff]
        %v226 = vld [vmem:[%s118 + $0x2b0] sm:$0xff]
        %v227 = vld [vmem:[%s118 + $0x2b8] sm:$0xff]
        %v228 = vld [vmem:[%s118 + $0x2c0] sm:$0xff]
        %v229 = vld [vmem:[%s118 + $0x2c8] sm:$0xff]
        %v230 = vld [vmem:[%s118 + $0x2d0] sm:$0xff]
        %v231 = vld [vmem:[%s118 + $0x2d8] sm:$0xff]
        %v232 = vld [vmem:[%s118 + $0x2e0] sm:$0xff]
        %v233 = vld [vmem:[%s118 + $0x2e8] sm:$0xff]
        %v234 = vld [vmem:[%s118 + $0x2f0] sm:$0xff]
        %v235 = vld [vmem:[%s118 + $0x2f8] sm:$0xff]
        %v236 = vld [vmem:[%s118 + $0x300] sm:$0xff]
        %v237 = vld [vmem:[%s118 + $0x308] sm:$0xff]
        %v238 = vld [vmem:[%s118 + $0x310] sm:$0xff]
        %v239 = vld [vmem:[%s118 + $0x318] sm:$0xff]
        %v240 = vld [vmem:[%s118 + $0x320] sm:$0xff]
        %v241 = vld [vmem:[%s118 + $0x328] sm:$0xff]
        %v242 = vld [vmem:[%s118 + $0x330] sm:$0xff]
        %v243 = vld [vmem:[%s118 + $0x338] sm:$0xff]
        %v244 = vld [vmem:[%s118 + $0x340] sm:$0xff]
        %v245 = vld [vmem:[%s118 + $0x348] sm:$0xff]
        %v246 = vld [vmem:[%s118 + $0x350] sm:$0xff]
        %v247 = vld [vmem:[%s118 + $0x358] sm:$0xff]
        %v248 = vld [vmem:[%s118 + $0x360] sm:$0xff]
        %v249 = vld [vmem:[%s118 + $0x368] sm:$0xff]
        %v250 = vld [vmem:[%s118 + $0x370] sm:$0xff]
        %v251 = vld [vmem:[%s118 + $0x378] sm:$0xff]
        %v252 = vld [vmem:[%s118 + $0x380] sm:$0xff]
        %v253 = vld [vmem:[%s118 + $0x388] sm:$0xff]
        %v254 = vld [vmem:[%s118 + $0x390] sm:$0xff]
        %v255 = vld [vmem:[%s118 + $0x398] sm:$0xff]
        %v256 = vld [vmem:[%s118 + $0x3a0] sm:$0xff]
        %v257 = vld [vmem:[%s118 + $0x3a8] sm:$0xff]
        %v258 = vld [vmem:[%s118 + $0x3b0] sm:$0xff]
        %v259 = vld [vmem:[%s118 + $0x3b8] sm:$0xff]
        %v260 = vld [vmem:[%s118 + $0x3c0] sm:$0xff]
        %v261 = vld [vmem:[%s118 + $0x3c8] sm:$0xff]
        %v262 = vld [vmem:[%s118 + $0x3d0] sm:$0xff]
        %v263 = vld [vmem:[%s118 + $0x3d8] sm:$0xff]
        %v264 = vld [vmem:[%s118 + $0x3e0] sm:$0xff]
        %v265 = vld [vmem:[%s118 + $0x3e8] sm:$0xff]
        %v266 = vld [vmem:[%s118 + $0x3f0] sm:$0xff]
        %v267 = vld [vmem:[%s118 + $0x3f8] sm:$0xff]
        %v268 = vstv %s139
        %v269 = vmul.f32 %v140, %v268
        %v270 = vmul.f32 %v141, %v268
        %v271 = vmul.f32 %v142, %v268
        %v272 = vmul.f32 %v143, %v268
        %v273 = vmul.f32 %v144, %v268
        %v274 = vmul.f32 %v145, %v268
        %v275 = vmul.f32 %v146, %v268
        %v276 = vmul.f32 %v147, %v268
        %v277 = vmul.f32 %v148, %v268
        %v278 = vmul.f32 %v149, %v268
        %v279 = vmul.f32 %v150, %v268
        %v280 = vmul.f32 %v151, %v268
        %v281 = vmul.f32 %v152, %v268
        %v282 = vmul.f32 %v153, %v268
        %v283 = vmul.f32 %v154, %v268
        %v284 = vmul.f32 %v155, %v268
        %v285 = vmul.f32 %v156, %v268
        %v286 = vmul.f32 %v157, %v268
        %v287 = vmul.f32 %v158, %v268
        %v288 = vmul.f32 %v159, %v268
        %v289 = vmul.f32 %v160, %v268
        %v290 = vmul.f32 %v161, %v268
        %v291 = vmul.f32 %v162, %v268
        %v292 = vmul.f32 %v163, %v268
        %v293 = vmul.f32 %v164, %v268
        %v294 = vmul.f32 %v165, %v268
        %v295 = vmul.f32 %v166, %v268
        %v296 = vmul.f32 %v167, %v268
        %v297 = vmul.f32 %v168, %v268
        %v298 = vmul.f32 %v169, %v268
        %v299 = vmul.f32 %v170, %v268
        %v300 = vmul.f32 %v171, %v268
        %v301 = vmul.f32 %v172, %v268
        %v302 = vmul.f32 %v173, %v268
        %v303 = vmul.f32 %v174, %v268
        %v304 = vmul.f32 %v175, %v268
        %v305 = vmul.f32 %v176, %v268
        %v306 = vmul.f32 %v177, %v268
        %v307 = vmul.f32 %v178, %v268
        %v308 = vmul.f32 %v179, %v268
        %v309 = vmul.f32 %v180, %v268
        %v310 = vmul.f32 %v181, %v268
        %v311 = vmul.f32 %v182, %v268
        %v312 = vmul.f32 %v183, %v268
        %v313 = vmul.f32 %v184, %v268
        %v314 = vmul.f32 %v185, %v268
        %v315 = vmul.f32 %v186, %v268
        %v316 = vmul.f32 %v187, %v268
        %v317 = vmul.f32 %v188, %v268
        %v318 = vmul.f32 %v189, %v268
        %v319 = vmul.f32 %v190, %v268
        %v320 = vmul.f32 %v191, %v268
        %v321 = vmul.f32 %v192, %v268
        %v322 = vmul.f32 %v193, %v268
        %v323 = vmul.f32 %v194, %v268
        %v324 = vmul.f32 %v195, %v268
        %v325 = vmul.f32 %v196, %v268
        %v326 = vmul.f32 %v197, %v268
        %v327 = vmul.f32 %v198, %v268
        %v328 = vmul.f32 %v199, %v268
        %v329 = vmul.f32 %v200, %v268
        %v330 = vmul.f32 %v201, %v268
        %v331 = vmul.f32 %v202, %v268
        %v332 = vmul.f32 %v203, %v268
        %v333 = vmul.f32 %v204, %v268
        %v334 = vmul.f32 %v205, %v268
        %v335 = vmul.f32 %v206, %v268
        %v336 = vmul.f32 %v207, %v268
        %v337 = vmul.f32 %v208, %v268
        %v338 = vmul.f32 %v209, %v268
        %v339 = vmul.f32 %v210, %v268
        %v340 = vmul.f32 %v211, %v268
        %v341 = vmul.f32 %v212, %v268
        %v342 = vmul.f32 %v213, %v268
        %v343 = vmul.f32 %v214, %v268
        %v344 = vmul.f32 %v215, %v268
        %v345 = vmul.f32 %v216, %v268
        %v346 = vmul.f32 %v217, %v268
        %v347 = vmul.f32 %v218, %v268
        %v348 = vmul.f32 %v219, %v268
        %v349 = vmul.f32 %v220, %v268
        %v350 = vmul.f32 %v221, %v268
        %v351 = vmul.f32 %v222, %v268
        %v352 = vmul.f32 %v223, %v268
        %v353 = vmul.f32 %v224, %v268
        %v354 = vmul.f32 %v225, %v268
        %v355 = vmul.f32 %v226, %v268
        %v356 = vmul.f32 %v227, %v268
        %v357 = vmul.f32 %v228, %v268
        %v358 = vmul.f32 %v229, %v268
        %v359 = vmul.f32 %v230, %v268
        %v360 = vmul.f32 %v231, %v268
        %v361 = vmul.f32 %v232, %v268
        %v362 = vmul.f32 %v233, %v268
        %v363 = vmul.f32 %v234, %v268
        %v364 = vmul.f32 %v235, %v268
        %v365 = vmul.f32 %v236, %v268
        %v366 = vmul.f32 %v237, %v268
        %v367 = vmul.f32 %v238, %v268
        %v368 = vmul.f32 %v239, %v268
        %v369 = vmul.f32 %v240, %v268
        %v370 = vmul.f32 %v241, %v268
        %v371 = vmul.f32 %v242, %v268
        %v372 = vmul.f32 %v243, %v268
        %v373 = vmul.f32 %v244, %v268
        %v374 = vmul.f32 %v245, %v268
        %v375 = vmul.f32 %v246, %v268
        %v376 = vmul.f32 %v247, %v268
        %v377 = vmul.f32 %v248, %v268
        %v378 = vmul.f32 %v249, %v268
        %v379 = vmul.f32 %v250, %v268
        %v380 = vmul.f32 %v251, %v268
        %v381 = vmul.f32 %v252, %v268
        %v382 = vmul.f32 %v253, %v268
        %v383 = vmul.f32 %v254, %v268
        %v384 = vmul.f32 %v255, %v268
        %v385 = vmul.f32 %v256, %v268
        %v386 = vmul.f32 %v257, %v268
        %v387 = vmul.f32 %v258, %v268
        %v388 = vmul.f32 %v259, %v268
        %v389 = vmul.f32 %v260, %v268
        %v390 = vmul.f32 %v261, %v268
        %v391 = vmul.f32 %v262, %v268
        %v392 = vmul.f32 %v263, %v268
        %v393 = vmul.f32 %v264, %v268
        %v394 = vmul.f32 %v265, %v268
        %v395 = vmul.f32 %v266, %v268
        %v396 = vmul.f32 %v267, %v268
        %397 = vst [vmem:[%s136] sm:$0xff] %v269
        %398 = vst [vmem:[%s136 + $0x8] sm:$0xff] %v270
        %399 = vst [vmem:[%s136 + $0x10] sm:$0xff] %v271
        %400 = vst [vmem:[%s136 + $0x18] sm:$0xff] %v272
        %401 = vst [vmem:[%s136 + $0x20] sm:$0xff] %v273
        %402 = vst [vmem:[%s136 + $0x28] sm:$0xff] %v274
        %403 = vst [vmem:[%s136 + $0x30] sm:$0xff] %v275
        %404 = vst [vmem:[%s136 + $0x38] sm:$0xff] %v276
        %405 = vst [vmem:[%s136 + $0x40] sm:$0xff] %v277
        %406 = vst [vmem:[%s136 + $0x48] sm:$0xff] %v278
        %407 = vst [vmem:[%s136 + $0x50] sm:$0xff] %v279
        %408 = vst [vmem:[%s136 + $0x58] sm:$0xff] %v280
        %409 = vst [vmem:[%s136 + $0x60] sm:$0xff] %v281
        %410 = vst [vmem:[%s136 + $0x68] sm:$0xff] %v282
        %411 = vst [vmem:[%s136 + $0x70] sm:$0xff] %v283
        %412 = vst [vmem:[%s136 + $0x78] sm:$0xff] %v284
        %413 = vst [vmem:[%s136 + $0x80] sm:$0xff] %v285
        %414 = vst [vmem:[%s136 + $0x88] sm:$0xff] %v286
        %415 = vst [vmem:[%s136 + $0x90] sm:$0xff] %v287
        %416 = vst [vmem:[%s136 + $0x98] sm:$0xff] %v288
        %417 = vst [vmem:[%s136 + $0xa0] sm:$0xff] %v289
        %418 = vst [vmem:[%s136 + $0xa8] sm:$0xff] %v290
        %419 = vst [vmem:[%s136 + $0xb0] sm:$0xff] %v291
        %420 = vst [vmem:[%s136 + $0xb8] sm:$0xff] %v292
        %421 = vst [vmem:[%s136 + $0xc0] sm:$0xff] %v293
        %422 = vst [vmem:[%s136 + $0xc8] sm:$0xff] %v294
        %423 = vst [vmem:[%s136 + $0xd0] sm:$0xff] %v295
        %424 = vst [vmem:[%s136 + $0xd8] sm:$0xff] %v296
        %425 = vst [vmem:[%s136 + $0xe0] sm:$0xff] %v297
        %426 = vst [vmem:[%s136 + $0xe8] sm:$0xff] %v298
        %427 = vst [vmem:[%s136 + $0xf0] sm:$0xff] %v299
        %428 = vst [vmem:[%s136 + $0xf8] sm:$0xff] %v300
        %429 = vst [vmem:[%s136 + $0x100] sm:$0xff] %v301
        %430 = vst [vmem:[%s136 + $0x108] sm:$0xff] %v302
        %431 = vst [vmem:[%s136 + $0x110] sm:$0xff] %v303
        %432 = vst [vmem:[%s136 + $0x118] sm:$0xff] %v304
        %433 = vst [vmem:[%s136 + $0x120] sm:$0xff] %v305
        %434 = vst [vmem:[%s136 + $0x128] sm:$0xff] %v306
        %435 = vst [vmem:[%s136 + $0x130] sm:$0xff] %v307
        %436 = vst [vmem:[%s136 + $0x138] sm:$0xff] %v308
        %437 = vst [vmem:[%s136 + $0x140] sm:$0xff] %v309
        %438 = vst [vmem:[%s136 + $0x148] sm:$0xff] %v310
        %439 = vst [vmem:[%s136 + $0x150] sm:$0xff] %v311
        %440 = vst [vmem:[%s136 + $0x158] sm:$0xff] %v312
        %441 = vst [vmem:[%s136 + $0x160] sm:$0xff] %v313
        %442 = vst [vmem:[%s136 + $0x168] sm:$0xff] %v314
        %443 = vst [vmem:[%s136 + $0x170] sm:$0xff] %v315
        %444 = vst [vmem:[%s136 + $0x178] sm:$0xff] %v316
        %445 = vst [vmem:[%s136 + $0x180] sm:$0xff] %v317
        %446 = vst [vmem:[%s136 + $0x188] sm:$0xff] %v318
        %447 = vst [vmem:[%s136 + $0x190] sm:$0xff] %v319
        %448 = vst [vmem:[%s136 + $0x198] sm:$0xff] %v320
        %449 = vst [vmem:[%s136 + $0x1a0] sm:$0xff] %v321
        %450 = vst [vmem:[%s136 + $0x1a8] sm:$0xff] %v322
        %451 = vst [vmem:[%s136 + $0x1b0] sm:$0xff] %v323
        %452 = vst [vmem:[%s136 + $0x1b8] sm:$0xff] %v324
        %453 = vst [vmem:[%s136 + $0x1c0] sm:$0xff] %v325
        %454 = vst [vmem:[%s136 + $0x1c8] sm:$0xff] %v326
        %455 = vst [vmem:[%s136 + $0x1d0] sm:$0xff] %v327
        %456 = vst [vmem:[%s136 + $0x1d8] sm:$0xff] %v328
        %457 = vst [vmem:[%s136 + $0x1e0] sm:$0xff] %v329
        %458 = vst [vmem:[%s136 + $0x1e8] sm:$0xff] %v330
        %459 = vst [vmem:[%s136 + $0x1f0] sm:$0xff] %v331
        %460 = vst [vmem:[%s136 + $0x1f8] sm:$0xff] %v332
        %461 = vst [vmem:[%s136 + $0x200] sm:$0xff] %v333
        %462 = vst [vmem:[%s136 + $0x208] sm:$0xff] %v334
        %463 = vst [vmem:[%s136 + $0x210] sm:$0xff] %v335
        %464 = vst [vmem:[%s136 + $0x218] sm:$0xff] %v336
        %465 = vst [vmem:[%s136 + $0x220] sm:$0xff] %v337
        %466 = vst [vmem:[%s136 + $0x228] sm:$0xff] %v338
        %467 = vst [vmem:[%s136 + $0x230] sm:$0xff] %v339
        %468 = vst [vmem:[%s136 + $0x238] sm:$0xff] %v340
        %469 = vst [vmem:[%s136 + $0x240] sm:$0xff] %v341
        %470 = vst [vmem:[%s136 + $0x248] sm:$0xff] %v342
        %471 = vst [vmem:[%s136 + $0x250] sm:$0xff] %v343
        %472 = vst [vmem:[%s136 + $0x258] sm:$0xff] %v344
        %473 = vst [vmem:[%s136 + $0x260] sm:$0xff] %v345
        %474 = vst [vmem:[%s136 + $0x268] sm:$0xff] %v346
        %475 = vst [vmem:[%s136 + $0x270] sm:$0xff] %v347
        %476 = vst [vmem:[%s136 + $0x278] sm:$0xff] %v348
        %477 = vst [vmem:[%s136 + $0x280] sm:$0xff] %v349
        %478 = vst [vmem:[%s136 + $0x288] sm:$0xff] %v350
        %479 = vst [vmem:[%s136 + $0x290] sm:$0xff] %v351
        %480 = vst [vmem:[%s136 + $0x298] sm:$0xff] %v352
        %481 = vst [vmem:[%s136 + $0x2a0] sm:$0xff] %v353
        %482 = vst [vmem:[%s136 + $0x2a8] sm:$0xff] %v354
        %483 = vst [vmem:[%s136 + $0x2b0] sm:$0xff] %v355
        %484 = vst [vmem:[%s136 + $0x2b8] sm:$0xff] %v356
        %485 = vst [vmem:[%s136 + $0x2c0] sm:$0xff] %v357
        %486 = vst [vmem:[%s136 + $0x2c8] sm:$0xff] %v358
        %487 = vst [vmem:[%s136 + $0x2d0] sm:$0xff] %v359
        %488 = vst [vmem:[%s136 + $0x2d8] sm:$0xff] %v360
        %489 = vst [vmem:[%s136 + $0x2e0] sm:$0xff] %v361
        %490 = vst [vmem:[%s136 + $0x2e8] sm:$0xff] %v362
        %491 = vst [vmem:[%s136 + $0x2f0] sm:$0xff] %v363
        %492 = vst [vmem:[%s136 + $0x2f8] sm:$0xff] %v364
        %493 = vst [vmem:[%s136 + $0x300] sm:$0xff] %v365
        %494 = vst [vmem:[%s136 + $0x308] sm:$0xff] %v366
        %495 = vst [vmem:[%s136 + $0x310] sm:$0xff] %v367
        %496 = vst [vmem:[%s136 + $0x318] sm:$0xff] %v368
        %497 = vst [vmem:[%s136 + $0x320] sm:$0xff] %v369
        %498 = vst [vmem:[%s136 + $0x328] sm:$0xff] %v370
        %499 = vst [vmem:[%s136 + $0x330] sm:$0xff] %v371
        %500 = vst [vmem:[%s136 + $0x338] sm:$0xff] %v372
        %501 = vst [vmem:[%s136 + $0x340] sm:$0xff] %v373
        %502 = vst [vmem:[%s136 + $0x348] sm:$0xff] %v374
        %503 = vst [vmem:[%s136 + $0x350] sm:$0xff] %v375
        %504 = vst [vmem:[%s136 + $0x358] sm:$0xff] %v376
        %505 = vst [vmem:[%s136 + $0x360] sm:$0xff] %v377
        %506 = vst [vmem:[%s136 + $0x368] sm:$0xff] %v378
        %507 = vst [vmem:[%s136 + $0x370] sm:$0xff] %v379
        %508 = vst [vmem:[%s136 + $0x378] sm:$0xff] %v380
        %509 = vst [vmem:[%s136 + $0x380] sm:$0xff] %v381
        %510 = vst [vmem:[%s136 + $0x388] sm:$0xff] %v382
        %511 = vst [vmem:[%s136 + $0x390] sm:$0xff] %v383
        %512 = vst [vmem:[%s136 + $0x398] sm:$0xff] %v384
        %513 = vst [vmem:[%s136 + $0x3a0] sm:$0xff] %v385
        %514 = vst [vmem:[%s136 + $0x3a8] sm:$0xff] %v386
        %515 = vst [vmem:[%s136 + $0x3b0] sm:$0xff] %v387
        %516 = vst [vmem:[%s136 + $0x3b8] sm:$0xff] %v388
        %517 = vst [vmem:[%s136 + $0x3c0] sm:$0xff] %v389
        %518 = vst [vmem:[%s136 + $0x3c8] sm:$0xff] %v390
        %519 = vst [vmem:[%s136 + $0x3d0] sm:$0xff] %v391
        %520 = vst [vmem:[%s136 + $0x3d8] sm:$0xff] %v392
        %521 = vst [vmem:[%s136 + $0x3e0] sm:$0xff] %v393
        %522 = vst [vmem:[%s136 + $0x3e8] sm:$0xff] %v394
        %523 = vst [vmem:[%s136 + $0x3f0] sm:$0xff] %v395
        %524 = vst [vmem:[%s136 + $0x3f8] sm:$0xff] %v396
        %s525 = sand.u32 %s54, 1
        %s526 = scalar_lea.sflag [#allocation6], %s525
        %s527 = sand.u32 %s54, 1
        %s528 = smul.addr %s527, 1024
        %s529 = scalar_lea.vmem [#allocation7], %s528
        // Predicated region
        $region29: #{tpu_custom_call.1} parent=23 // pred_check
          %p530 = pneg %p64
        $region30: #{tpu_custom_call.1} parent=23 // pred_check_branch
          %532 = sbr.rel (%p530) target = $region32
        $region31: #{tpu_custom_call.1} parent=23 // pred_region
          %s533 = smul.u32 128, %s20
          %s535 = ssub.s32 16384, 16384
          %536 = vsyncadd %s526, %s535
          %s537 = smul.addr %s533, 128
          %s538 = scalar_lea.hbm %s2, %s537
          %s539 = sshll.u32 %s529, 4
          %s540 = int_to_ptr.vmem [resolvable:$true] %s539
          %545 = dma.vmem_to_hbm [thread:$0]  %s540, 16384, %s538, %s526, 128, 128, 8
        $region32: #{tpu_custom_call.1} parent=23 // pred_fallthru
          _
      $region24: #{tpu_custom_call.1} parent=5 // pred_fallthru
        _
      %p546 = scmp.le.s32.totalorder 2, %s15
      // Predicated region
      $region33: #{tpu_custom_call.1} parent=5 // pred_check
        %p547 = pneg %p546
      $region34: #{tpu_custom_call.1} parent=5 // pred_check_branch
        %549 = sbr.rel (%p547) target = $region36
      $region35: #{tpu_custom_call.1} parent=5 // pred_region
        %s550 = ssub.s32 %s15, 2
        // Predicated region
        $region37: #{tpu_custom_call.1} parent=35 // pred_check
          %p551 = pneg %p70
        $region38: #{tpu_custom_call.1} parent=35 // pred_check_branch
          %553 = sbr.rel (%p551) target = $region40
        $region39: #{tpu_custom_call.1} parent=35 // pred_region
          %s554 = sand.u32 %s55, 1
          %s555 = scalar_lea.sflag [#allocation6], %s554
          %s556 = sand.u32 %s55, 1
          %s557 = smul.addr %s556, 1024
          %s558 = scalar_lea.vmem [#allocation7], %s557
          %559 = dma.done %s555, 16384
        $region40: #{tpu_custom_call.1} parent=35 // pred_fallthru
          _
      $region36: #{tpu_custom_call.1} parent=5 // pred_fallthru
        _
    $region6: #{tpu_custom_call.1} parent=1 // loop_footer
      %s19 = sadd.s32 1, %s15
    $region7: #{tpu_custom_call.1} parent=1 // loop_footer_branch
      %14 = sbr.rel target = $region3
    $region8: #{tpu_custom_call.1} parent=1 // loop_exit
      _
    %560 = vsyncpa [#allocation5], 1
    %s561 = scalar_lea.sflag [#allocation5], 1
    %562 = vsyncpa %s561, 1
    %563 = vsyncpa [#allocation6], 1
    %s564 = scalar_lea.sflag [#allocation6], 1
    %565 = vsyncpa %s564, 1

</llo_original>
